<compile_context>
chip_gen: v7x
topology: tpu7x:2x2x1
jax: 0.10.0
libtpu: 0.0.40
codegen_flags: <defaults>
</compile_context>

<pallas_src>
import functools

import jax
import jax.numpy as jnp
from jax.experimental import pallas as pl
from jax.experimental.pallas import tpu as pltpu


# ----------------------------------------------------------------------------
# Helpers
# ----------------------------------------------------------------------------
def _round_up(x, m):
    return (x + m - 1) // m * m


def _compiler_params(dimension_semantics, working_set_bytes):
    """dimension_semantics + an explicit VMEM cap only when the default would be too small."""
    kwargs = {"dimension_semantics": dimension_semantics}
    need = int(2 * working_set_bytes + (2 << 20))      # double-buffering + slack
    if need > (16 << 20):                              # smallest default scoped-VMEM (v5e)
        kwargs["vmem_limit_bytes"] = int(min(need, 56 << 20))   # stay under v7x's 64 MiB
    return pltpu.CompilerParams(**kwargs)


def _pick_row_tile(M, Cin, Ncols, itemsize, budget=24 << 20):
    """Largest power-of-two row tile for the ConvTranspose matmul that fits the budget."""
    cap = _round_up(M, 8)
    best = 8
    cand = 8
    while cand <= min(cap, 2048):
        need = 2 * cand * (Cin * itemsize + Ncols * 4) + Cin * Ncols * itemsize + Ncols * 4
        if need <= budget:
            best = cand
        cand *= 2
    tm = best
    Mp = _round_up(M, tm)
    # Keep at least two grid steps so the software pipeline is actually exercised.
    while Mp // tm < 2 and tm > 8:
        tm //= 2
        Mp = _round_up(M, tm)
    return tm, Mp


def _pick_depth_tile(D, H, W, Cin, Cout, itemsize, budget=40 << 20):
    """Largest depth tile whose slab + temps + double-buffering fit the VMEM budget."""
    best = 1
    for cand in range(1, D + 1):
        if D % cand:
            continue
        rows = cand * H * W
        need = (2 * (cand + 2) * (H + 2) * (W + 2) * Cin * itemsize   # input slab (x2 buf)
                + 2 * rows * Cout * itemsize                          # y tile (x2 buf)
                + rows * 3 * Cin * itemsize                           # folded patch temp
                + 2 * rows * Cout * 4                                 # f32 accumulator
                + 9 * 3 * Cin * Cout * itemsize)                      # weights
        if need <= budget:
            best = cand
    # Keep >= 2 depth steps so the stats accumulation / pipelining path is exercised.
    if best == D and D > 1:
        for cand in range(D // 2, 0, -1):
            if D % cand == 0:
                return cand
    return best


# ----------------------------------------------------------------------------
# Kernel 1: row-tiled matmul + bias  (drives the k=2 / s=2 ConvTranspose3d)
#   out[n, 2d+i, 2h+j, 2w+k, co] = sum_ci x[n,d,h,w,ci] * W[ci,co,i,j,k] + b[co]
# i.e. one (M, Cin) @ (Cin, 8*Cout) matmul; the interleave into the upsampled grid
# is data movement done in the wrapper.
# ----------------------------------------------------------------------------
def _matmul_bias_kernel(x_ref, w_ref, b_ref, o_ref):
    y = jnp.dot(x_ref[...], w_ref[...], preferred_element_type=jnp.float32) + b_ref[...]
    o_ref[...] = y.astype(o_ref.dtype)


def transpose_conv_upsample(x, wt, bt, *, compute_dtype=jnp.float32):
    """x: (N,D,H,W,Cin); wt: (Cin,Cout,2,2,2) [PyTorch]; bt: (Cout,)."""
    N, D, H, W, Cin = x.shape
    Cout = wt.shape[1]
    M = N * D * H * W
    isz = jnp.dtype(compute_dtype).itemsize

    x2d = x.reshape(M, Cin).astype(compute_dtype)
    # columns ordered (i, j, k, cout)
    w2d = jnp.transpose(wt, (0, 2, 3, 4, 1)).reshape(Cin, 8 * Cout).astype(compute_dtype)
    b2d = jnp.tile(bt, (8,)).reshape(1, 8 * Cout).astype(jnp.float32)

    tm, Mp = _pick_row_tile(M, Cin, 8 * Cout, isz)
    if Mp != M:
        x2d = jnp.pad(x2d, ((0, Mp - M), (0, 0)))

    work = tm * (Cin * isz + 8 * Cout * 4) + Cin * 8 * Cout * isz + 8 * Cout * 4
    out2d = pl.pallas_call(
        _matmul_bias_kernel,
        out_shape=jax.ShapeDtypeStruct((Mp, 8 * Cout), compute_dtype),
        grid=(Mp // tm,),
        in_specs=[
            pl.BlockSpec((tm, Cin), lambda i: (i, 0)),
            pl.BlockSpec((Cin, 8 * Cout), lambda i: (0, 0)),
            pl.BlockSpec((1, 8 * Cout), lambda i: (0, 0)),
        ],
        out_specs=pl.BlockSpec((tm, 8 * Cout), lambda i: (i, 0)),
        compiler_params=_compiler_params(("parallel",), work),
    )(x2d, w2d, b2d)

    # Interleave the 8 sub-voxel outputs into the 2x upsampled grid.
    # TODO(synk): this interleave and the channel concat downstream are still XLA data
    # movement; folding them into the conv1 kernel would remove one HBM round trip.
    y = out2d[:M].reshape(N, D, H, W, 2, 2, 2, Cout)
    y = jnp.transpose(y, (0, 1, 4, 2, 5, 3, 6, 7)).reshape(N, 2 * D, 2 * H, 2 * W, Cout)
    return y


# ----------------------------------------------------------------------------
# Kernel 2a: Conv3d(3x3x3, pad=1, no bias), tiled over (batch, depth-slab), with the
# kw taps folded into the contraction (K = 3*Cin, 9 dots per tile).  Per-instance
# sum / sum-of-squares are accumulated into a resident stats output (two-pass
# InstanceNorm).
# ----------------------------------------------------------------------------
def _conv3x3_stats_kernel(x_ref, w_ref, y_ref, stats_ref):
    # x_ref    : (1, td+2, H+2, W+2, Cin)   padded depth slab (halo = 1) for one tile
    # w_ref    : (3, 3, 3*Cin, Cout)        kw taps folded into the contraction dim
    # y_ref    : (1, td, H, W, Cout)        raw conv output tile
    # stats_ref: (1, 2, Cout)  f32          [sum, sum_sq], accumulated across depth tiles
    _, td, H, W, Cout = y_ref.shape
    Cin = x_ref.shape[-1]

    acc = jnp.zeros((td * H * W, Cout), jnp.float32)
    for kd in range(3):
        for kh in range(3):
            v = x_ref[0, kd:kd + td, kh:kh + H]                      # (td, H, W+2, Cin)
            patch = jnp.concatenate(
                [v[:, :, 0:W, :], v[:, :, 1:W + 1, :], v[:, :, 2:W + 2, :]], axis=-1)
            acc = acc + jnp.dot(patch.reshape(td * H * W, 3 * Cin),
                                w_ref[kd, kh],
                                preferred_element_type=jnp.float32)

    y_ref[...] = acc.reshape(1, td, H, W, Cout).astype(y_ref.dtype)

    @pl.when(pl.program_id(1) == 0)
    def _init():
        stats_ref[...] = jnp.zeros_like(stats_ref)

    ssum = jnp.sum(acc, axis=0, keepdims=True)           # (1, Cout)
    ssq = jnp.sum(acc * acc, axis=0, keepdims=True)      # (1, Cout)
    stats_ref[...] = stats_ref[...] + jnp.concatenate([ssum, ssq], axis=0)[None]


# ----------------------------------------------------------------------------
# Kernel 2b: InstanceNorm3d(affine) + ReLU finalize pass (tiled, fully parallel).
# ----------------------------------------------------------------------------
def _instnorm_relu_kernel(y_ref, stats_ref, g_ref, b_ref, o_ref, *, inv_count, eps):
    mean = stats_ref[0, 0:1, :] * inv_count                         # (1, Cout)
    var = stats_ref[0, 1:2, :] * inv_count - mean * mean            # biased variance
    scale = g_ref[...] * jax.lax.rsqrt(var + eps)                   # hoisted once per tile
    shift = b_ref[...] - mean * scale
    y = y_ref[...].astype(jnp.float32)
    o_ref[...] = jnp.maximum(y * scale + shift, 0.0).astype(o_ref.dtype)


def conv3x3_instnorm_relu(x, w, gamma, beta, *, compute_dtype=jnp.float32,
                          out_dtype=jnp.float32, eps=1e-5):
    """x: (N,D,H,W,Cin); w: (Cout,Cin,3,3,3) [PyTorch]; gamma/beta: (Cout,)."""
    N, D, H, W, Cin = x.shape
    Cout = w.shape[0]
    isz = jnp.dtype(compute_dtype).itemsize

    td = _pick_depth_tile(D, H, W, Cin, Cout, isz)
    nD = D // td

    # Weight with the kw taps folded into the contraction: (3, 3, 3*Cin, Cout).
    wk = jnp.transpose(w, (2, 3, 4, 1, 0)).reshape(3, 3, 3 * Cin, Cout).astype(compute_dtype)

    # Pre-gather overlapping depth slabs (halo = 1) so the kernel never needs an
    # overlapping BlockSpec window.  Duplication overhead: (td+2)/td.
    xp = jnp.pad(x, ((0, 0), (1, 1), (1, 1), (1, 1), (0, 0)))
    idx = (jnp.arange(nD)[:, None] * td + jnp.arange(td + 2)[None, :]).reshape(-1)
    slabs = jnp.take(xp, idx, axis=1).astype(compute_dtype)
    slabs = slabs.reshape(N * nD, td + 2, H + 2, W + 2, Cin)

    rows = td * H * W
    conv_work = ((td + 2) * (H + 2) * (W + 2) * Cin * isz
                 + rows * Cout * isz
                 + rows * 3 * Cin * isz
                 + 2 * rows * Cout * 4
                 + 9 * 3 * Cin * Cout * isz)

    y, stats = pl.pallas_call(
        _conv3x3_stats_kernel,
        out_shape=(jax.ShapeDtypeStruct((N, D, H, W, Cout), compute_dtype),
                   jax.ShapeDtypeStruct((N, 2, Cout), jnp.float32)),
        grid=(N, nD),
        in_specs=[
            pl.BlockSpec((1, td + 2, H + 2, W + 2, Cin),
                         lambda n, d: (n * nD + d, 0, 0, 0, 0)),
            pl.BlockSpec((3, 3, 3 * Cin, Cout), lambda n, d: (0, 0, 0, 0)),
        ],
        out_specs=[
            pl.BlockSpec((1, td, H, W, Cout), lambda n, d: (n, d, 0, 0, 0)),
            pl.BlockSpec((1, 2, Cout), lambda n, d: (n, 0, 0)),
        ],
        compiler_params=_compiler_params(("parallel", "arbitrary"), conv_work),
    )(slabs, wk)

    g2 = gamma.reshape(1, Cout).astype(jnp.float32)
    b2 = beta.reshape(1, Cout).astype(jnp.float32)
    norm_work = 2 * rows * Cout * max(isz, 4) + 8 * Cout * 4

    out = pl.pallas_call(
        functools.partial(_instnorm_relu_kernel,
                          inv_count=1.0 / float(D * H * W), eps=float(eps)),
        out_shape=jax.ShapeDtypeStruct((N, D, H, W, Cout), out_dtype),
        grid=(N, nD),
        in_specs=[
            pl.BlockSpec((1, td, H, W, Cout), lambda n, d: (n, d, 0, 0, 0)),
            pl.BlockSpec((1, 2, Cout), lambda n, d: (n, 0, 0)),
            pl.BlockSpec((1, Cout), lambda n, d: (0, 0)),
            pl.BlockSpec((1, Cout), lambda n, d: (0, 0)),
        ],
        out_specs=pl.BlockSpec((1, td, H, W, Cout), lambda n, d: (n, d, 0, 0, 0)),
        compiler_params=_compiler_params(("parallel", "parallel"), norm_work),
    )(y, stats, g2, b2)
    return out


# ----------------------------------------------------------------------------
# Full UpsampleBlock forward (Pallas path)
# ----------------------------------------------------------------------------
def upsample_block_forward(x, skip, params, *, compute_dtype=jnp.float32):
    up = transpose_conv_upsample(x, params["wt"], params["bt"], compute_dtype=compute_dtype)
    cat = jnp.concatenate([up, skip.astype(up.dtype)], axis=-1)     # channel concat (glue)
    h = conv3x3_instnorm_relu(cat, params["w1"], params["g1"], params["b1"],
                              compute_dtype=compute_dtype, out_dtype=compute_dtype)
    out = conv3x3_instnorm_relu(h, params["w2"], params["g2"], params["b2"],
                                compute_dtype=compute_dtype, out_dtype=jnp.float32)
    return out


# ----------------------------------------------------------------------------
# Pure-JAX reference (for in-script correctness check)
# ----------------------------------------------------------------------------
def ref_forward(x, skip, params):
    N, D, H, W, Cin = x.shape
    wt = params["wt"]
    Cout = wt.shape[1]
    up = jnp.einsum("ndhwc,coijk->ndhwijko", x, wt)
    up = jnp.transpose(up, (0, 1, 4, 2, 5, 3, 6, 7)).reshape(N, 2 * D, 2 * H, 2 * W, Cout)
    up = up + params["bt"]
    cat = jnp.concatenate([up, skip], axis=-1)

    def conv_block(z, w, g, b):
        wk = jnp.transpose(w, (2, 3, 4, 1, 0))  # DHWIO
        y = jax.lax.conv_general_dilated(
            z, wk, (1, 1, 1), "SAME",
            dimension_numbers=("NDHWC", "DHWIO", "NDHWC"),
        )
        mean = jnp.mean(y, axis=(1, 2, 3), keepdims=True)
        var = jnp.mean((y - mean) ** 2, axis=(1, 2, 3), keepdims=True)
        y = (y - mean) * jax.lax.rsqrt(var + 1e-5) * g + b
        return jnp.maximum(y, 0.0)

    h = conv_block(cat, params["w1"], params["g1"], params["b1"])
    return conv_block(h, params["w2"], params["g2"], params["b2"])


if __name__ == "__main__":
    # Small, module-consistent shapes (NDHWC activations).
    in_channels, out_channels = 32, 16
    N, D, H, W = 2, 4, 8, 8                       # x spatial; skip spatial = 2x

    key = jax.random.PRNGKey(0)
    keys = jax.random.split(key, 8)
    params = {
        # ConvTranspose3d weight: (Cin, Cout, 2, 2, 2), bias: (Cout,)
        "wt": 0.1 * jax.random.normal(keys[0], (in_channels, out_channels, 2, 2, 2), jnp.float32),
        "bt": 0.1 * jax.random.normal(keys[1], (out_channels,), jnp.float32),
        # conv1: Conv3d(2*Cout -> Cout, 3x3x3, bias=False) + InstanceNorm affine
        "w1": 0.1 * jax.random.normal(keys[2], (out_channels, 2 * out_channels, 3, 3, 3), jnp.float32),
        "g1": 1.0 + 0.1 * jax.random.normal(keys[3], (out_channels,), jnp.float32),
        "b1": 0.1 * jax.random.normal(keys[4], (out_channels,), jnp.float32),
        # conv2: Conv3d(Cout -> Cout, 3x3x3, bias=False) + InstanceNorm affine
        "w2": 0.1 * jax.random.normal(keys[5], (out_channels, out_channels, 3, 3, 3), jnp.float32),
        "g2": 1.0 + 0.1 * jax.random.normal(keys[6], (out_channels,), jnp.float32),
        "b2": 0.1 * jax.random.normal(keys[7], (out_channels,), jnp.float32),
    }

    kx, ks = jax.random.split(jax.random.PRNGKey(42))
    x = jax.random.normal(kx, (N, D, H, W, in_channels), jnp.float32)
    skip = jax.random.normal(ks, (N, 2 * D, 2 * H, 2 * W, out_channels), jnp.float32)

    ref = jax.block_until_ready(ref_forward(x, skip, params))

    # f32 path: tight check vs the pure-JAX reference.
    out = jax.block_until_ready(upsample_block_forward(x, skip, params, compute_dtype=jnp.float32))
    assert out.shape == (N, 2 * D, 2 * H, 2 * W, out_channels)
    assert bool(jnp.allclose(out, ref, atol=1e-3, rtol=1e-3)), "f32 mismatch vs reference"

    # bf16 matmul inputs / f32 accumulation path (v6e/v7x MXU optimization): loose check.
    out_bf = jax.block_until_ready(upsample_block_forward(x, skip, params, compute_dtype=jnp.bfloat16))
    assert out_bf.shape == ref.shape
    assert float(jnp.max(jnp.abs(out_bf.astype(jnp.float32) - ref))) < 0.25, "bf16 path diverged"

    print("KERNEL_OK")
</pallas_src>

<mosaic_0001>
module attributes {stable_mosaic.version = 11 : i64} {
  func.func @_matmul_bias_kernel(%arg0: i32, %arg1: memref<256x32xf32, #tpu.memory_space<vmem>>, %arg2: memref<32x128xf32, #tpu.memory_space<vmem>>, %arg3: memref<1x128xf32, #tpu.memory_space<vmem>>, %arg4: memref<256x128xf32, #tpu.memory_space<vmem>>) attributes {dimension_semantics = [#tpu.dimension_semantics<parallel>], iteration_bounds = array<i64: 2>, scalar_prefetch = 0 : i64, scratch_operands = 0 : i64, tpu.core_type = #tpu.core_type<tc>, window_params = [{transform_indices = @transform_0, window_bounds = array<i64: 256, 32>}, {pipeline_mode = #tpu.pipeline_mode<synchronous>, transform_indices = @transform_1, window_bounds = array<i64: 32, 128>}, {pipeline_mode = #tpu.pipeline_mode<synchronous>, transform_indices = @transform_2, window_bounds = array<i64: 1, 128>}, {transform_indices = @transform_3, window_bounds = array<i64: 256, 128>}]} {
    %c0 = arith.constant 0 : index
    %c0_0 = arith.constant 0 : index
    %0 = vector.load %arg1[%c0, %c0_0] : memref<256x32xf32, #tpu.memory_space<vmem>>, vector<256x32xf32>
    %c0_1 = arith.constant 0 : index
    %c0_2 = arith.constant 0 : index
    %1 = vector.load %arg2[%c0_1, %c0_2] : memref<32x128xf32, #tpu.memory_space<vmem>>, vector<32x128xf32>
    %cst = arith.constant dense<0.000000e+00> : vector<256x128xf32>
    %2 = tpu.matmul %0, %1, %cst {dimension_numbers = #tpu.dot_dimension_numbers<[1], [0], [0], [1], [0, 0, 1, 1], [], []>} : vector<256x32xf32>, vector<32x128xf32>, vector<256x128xf32> -> vector<256x128xf32>
    %c0_3 = arith.constant 0 : index
    %c0_4 = arith.constant 0 : index
    %3 = vector.load %arg3[%c0_3, %c0_4] : memref<1x128xf32, #tpu.memory_space<vmem>>, vector<1x128xf32>
    %4 = vector.broadcast %3 : vector<1x128xf32> to vector<256x128xf32>
    %5 = arith.addf %2, %4 : vector<256x128xf32>
    %c0_5 = arith.constant 0 : index
    %c0_6 = arith.constant 0 : index
    %6 = vector.load %arg4[%c0_5, %c0_6] : memref<256x128xf32, #tpu.memory_space<vmem>>, vector<256x128xf32>
    tpu.vector_store %arg4[%c0_5, %c0_6], %5 {strides = array<i32>} : memref<256x128xf32, #tpu.memory_space<vmem>>, vector<256x128xf32>,
    return
  }
  func.func @transform_0(%arg0: i32) -> (i32, i32) {
    %c0_i32 = arith.constant 0 : i32
    %c0_i32_0 = arith.constant 0 : i32
    return %arg0, %c0_i32 : i32, i32
  }
  func.func @transform_1(%arg0: i32) -> (i32, i32) {
    %c0_i32 = arith.constant 0 : i32
    %c0_i32_0 = arith.constant 0 : i32
    %c0_i32_1 = arith.constant 0 : i32
    return %c0_i32, %c0_i32_0 : i32, i32
  }
  func.func @transform_2(%arg0: i32) -> (i32, i32) {
    %c0_i32 = arith.constant 0 : i32
    %c0_i32_0 = arith.constant 0 : i32
    %c0_i32_1 = arith.constant 0 : i32
    return %c0_i32, %c0_i32_0 : i32, i32
  }
  func.func @transform_3(%arg0: i32) -> (i32, i32) {
    %c0_i32 = arith.constant 0 : i32
    %c0_i32_0 = arith.constant 0 : i32
    return %arg0, %c0_i32 : i32, i32
  }
}

</mosaic_0001>

<llo_original>
// kernel: tpu_custom_call.1
$region0: #{tpu_custom_call.1}
  #allocation0 [shape = 'u32[]', space=smem, size = 0x4, offset = 0x4, fixed_abs, tag = 'smem constant byte address 0x4 - core index']
  #allocation1 [shape = 'u32[144,128]{1,0:T(1,128)}', space=vmem, size = 0x12000, scoped, tag = 'internal scratch']
  %s0 = inlined_call_operand.vmem [shape: f32[512,32], index: 0, kind: input, shape index: {}]
  %s1 = inlined_call_operand.vmem [shape: f32[32,128], index: 1, kind: input, shape index: {}]
  %s2 = inlined_call_operand.vmem [shape: f32[1,128], index: 2, kind: input, shape index: {}]
  %s3 = inlined_call_operand.hbm [shape: f32[512,128], index: 3, kind: output, shape index: {}]
  %s4 = sld [smem:[#allocation0]]
  $region45: #{tpu_custom_call.1} parent=0
    _
  %s6 = ssub.s32 1, %s4
  %s7 = scalar_select 0, %s6, %s4
  $region1: #{tpu_custom_call.1} parent=0
    #allocation2 [shape = 'u8[262144]{0}', space=vmem, size = 0x40000, scoped, tag = 'output window, operand 0']
    #allocation3 [shape = 's32[2]{0}', space=sflag, size = 0x8, scoped, tag = 'scoped memory for tpu_custom_call.1']
    %8 = vsyncpa [#allocation3], 0
    %s9 = scalar_lea.sflag [#allocation3], 1
    %10 = vsyncpa %s9, 0
    loop: start=0, step=1, limit=4
    $region2: #{tpu_custom_call.1} parent=1 // loop_pre_header
      _
    $region3: #{tpu_custom_call.1} parent=1 // loop_header
      %s12 = sphi 0, %s16
      %p13 = scmp.ge.s32.totalorder %s12, 4
      %s22 = sphi 0, %s24
      %s25 = sphi 0, %s22
      %s26 = sphi 0, %s25
      %s42 = sphi 0, %s26
      %s46 = sphi 0, %s46
      %s48 = sphi 0, %s46
      %s49 = sphi 0, %s48
      %s63 = sphi 0, %s49
      %s67 = sphi 0, %s67
      %s69 = sphi 0, %s67
      %s70 = sphi 0, %s69
      %s84 = sphi 0, %s70
      %s90 = sphi 0, %s92
      %s93 = sphi 0, %s90
      %s94 = sphi 0, %s93
      %s110 = sphi 0, %s94
    $region4: #{tpu_custom_call.1} parent=1 // loop_header_branch
      %15 = sbr.rel (%p13) target = $region8
    $region5: #{tpu_custom_call.1} parent=1 // loop_body
      %s17 = ssub.s32 %s12, 1
      %s18 = ssub.s32 %s12, 2
      %s19 = sadd.s32 %s12, 1
      %s20 = ssub.s32 %s12, %s19
      %p21 = scmp.eq.s32.totalorder %s20, 0
      %s23 = sadd.s32 %s22, 1
      %s24 = scalar_select %p21, %s22, %s23
      %p27 = pneg %p21
      %p28 = scmp.eq.s32.totalorder %s12, 1
      %p29 = por %p27, %p28
      %p30 = scmp.ne.s32.totalorder %s22, %s25
      %p31 = scmp.eq.s32.totalorder %s12, 0
      %p32 = por %p30, %p31
      %p33 = scmp.ne.s32.totalorder %s22, %s25
      %p34 = scmp.eq.s32.totalorder %s17, 1
      %p35 = por %p33, %p34
      %p36 = scmp.ne.s32.totalorder %s25, %s26
      %p37 = scmp.eq.s32.totalorder %s17, 0
      %p38 = por %p36, %p37
      %p39 = scmp.ne.s32.totalorder %s25, %s26
      %p40 = scmp.eq.s32.totalorder %s18, 1
      %p41 = por %p39, %p40
      %p43 = scmp.ne.s32.totalorder %s26, %s42
      %p44 = scmp.eq.s32.totalorder %s18, 0
      %p45 = por %p43, %p44
      %s47 = sadd.s32 %s46, 1
      %p50 = scmp.eq.s32.totalorder %s12, 1
      %p51 = scmp.ne.s32.totalorder %s46, %s48
      %p52 = scmp.eq.s32.totalorder %s12, 0
      %p53 = por %p51, %p52
      %p54 = scmp.ne.s32.totalorder %s46, %s48
      %p55 = scmp.eq.s32.totalorder %s17, 1
      %p56 = por %p54, %p55
      %p57 = scmp.ne.s32.totalorder %s48, %s49
      %p58 = scmp.eq.s32.totalorder %s17, 0
      %p59 = por %p57, %p58
      %p60 = scmp.ne.s32.totalorder %s48, %s49
      %p61 = scmp.eq.s32.totalorder %s18, 1
      %p62 = por %p60, %p61
      %p64 = scmp.ne.s32.totalorder %s49, %s63
      %p65 = scmp.eq.s32.totalorder %s18, 0
      %p66 = por %p64, %p65
      %s68 = sadd.s32 %s67, 1
      %p71 = scmp.eq.s32.totalorder %s12, 1
      %p72 = scmp.ne.s32.totalorder %s67, %s69
      %p73 = scmp.eq.s32.totalorder %s12, 0
      %p74 = por %p72, %p73
      %p75 = scmp.ne.s32.totalorder %s67, %s69
      %p76 = scmp.eq.s32.totalorder %s17, 1
      %p77 = por %p75, %p76
      %p78 = scmp.ne.s32.totalorder %s69, %s70
      %p79 = scmp.eq.s32.totalorder %s17, 0
      %p80 = por %p78, %p79
      %p81 = scmp.ne.s32.totalorder %s69, %s70
      %p82 = scmp.eq.s32.totalorder %s18, 1
      %p83 = por %p81, %p82
      %p85 = scmp.ne.s32.totalorder %s70, %s84
      %p86 = scmp.eq.s32.totalorder %s18, 0
      %p87 = por %p85, %p86
      %s88 = ssub.s32 %s12, %s19
      %p89 = scmp.eq.s32.totalorder %s88, 0
      %s91 = sadd.s32 %s90, 1
      %s92 = scalar_select %p89, %s90, %s91
      %p95 = pneg %p89
      %p96 = scmp.eq.s32.totalorder %s12, 1
      %p97 = por %p95, %p96
      %p98 = scmp.ne.s32.totalorder %s90, %s93
      %p99 = scmp.eq.s32.totalorder %s12, 0
      %p100 = por %p98, %p99
      %p101 = scmp.ne.s32.totalorder %s90, %s93
      %p102 = scmp.eq.s32.totalorder %s17, 1
      %p103 = por %p101, %p102
      %p104 = scmp.ne.s32.totalorder %s93, %s94
      %p105 = scmp.eq.s32.totalorder %s17, 0
      %p106 = por %p104, %p105
      %p107 = scmp.ne.s32.totalorder %s93, %s94
      %p108 = scmp.eq.s32.totalorder %s18, 1
      %p109 = por %p107, %p108
      %p111 = scmp.ne.s32.totalorder %s94, %s110
      %p112 = scmp.eq.s32.totalorder %s18, 0
      %p113 = por %p111, %p112
      %p114 = scmp.le.s32.totalorder 1, %s12
      %p115 = scmp.lt.s32.totalorder %s12, 3
      %p116 = pnand %p114, %p115
      %p117 = pneg %p116
      // Predicated region
      $region9: #{tpu_custom_call.1} parent=5 // pred_check
        _
      $region10: #{tpu_custom_call.1} parent=5 // pred_check_branch
        %119 = sbr.rel (%p116) target = $region12
      $region11: #{tpu_custom_call.1} parent=5 // pred_region
        %s120 = ssub.s32 %s12, 1
        // Predicated region
        $region13: #{tpu_custom_call.1} parent=11 // pred_check
          %p121 = pneg %p59
        $region14: #{tpu_custom_call.1} parent=11 // pred_check_branch
          %123 = sbr.rel (%p121) target = $region16
        $region15: #{tpu_custom_call.1} parent=11 // pred_region
          _
        $region16: #{tpu_custom_call.1} parent=11 // pred_fallthru
          _
        // Predicated region
        $region17: #{tpu_custom_call.1} parent=11 // pred_check
          %p124 = pneg %p80
        $region18: #{tpu_custom_call.1} parent=11 // pred_check_branch
          %126 = sbr.rel (%p124) target = $region20
        $region19: #{tpu_custom_call.1} parent=11 // pred_region
          _
        $region20: #{tpu_custom_call.1} parent=11 // pred_fallthru
          _
      $region12: #{tpu_custom_call.1} parent=5 // pred_fallthru
        _
      %p127 = scmp.lt.s32.totalorder %s12, 2
      // Predicated region
      $region21: #{tpu_custom_call.1} parent=5 // pred_check
        %p128 = pneg %p127
      $region22: #{tpu_custom_call.1} parent=5 // pred_check_branch
        %130 = sbr.rel (%p128) target = $region24
      $region23: #{tpu_custom_call.1} parent=5 // pred_region
        // Predicated region
        $region25: #{tpu_custom_call.1} parent=23 // pred_check
          %p131 = pneg %p32
        $region26: #{tpu_custom_call.1} parent=23 // pred_check_branch
          %133 = sbr.rel (%p131) target = $region28
        $region27: #{tpu_custom_call.1} parent=23 // pred_region
          %s134 = smul.u32 32, %s12
          %p135 = scmp.lt.s32.totalorder %s134, 63
          %s136 = scalar_select %p135, %s134, 63
          %s137 = smul.addr %s136, 8
          %s138 = scalar_lea.vmem %s0, %s137
          %s139 = smul.u32 32, %s12
        $region28: #{tpu_custom_call.1} parent=23 // pred_fallthru
          _
      $region24: #{tpu_custom_call.1} parent=5 // pred_fallthru
        _
      %p140 = scmp.le.s32.totalorder 1, %s12
      %p141 = scmp.lt.s32.totalorder %s12, 3
      %p142 = pnand %p140, %p141
      %p143 = pneg %p142
      // Predicated region
      $region29: #{tpu_custom_call.1} parent=5 // pred_check
        _
      $region30: #{tpu_custom_call.1} parent=5 // pred_check_branch
        %145 = sbr.rel (%p142) target = $region32
      $region31: #{tpu_custom_call.1} parent=5 // pred_region
        %s146 = ssub.s32 %s12, 1
        %s147 = smul.u32 32, %s17
        %p148 = scmp.lt.s32.totalorder %s147, 63
        %s149 = scalar_select %p148, %s147, 63
        %s150 = smul.addr %s149, 8
        %s151 = scalar_lea.vmem %s0, %s150
        %p152 = pneg %p38
        %p153 = pneg %p35
        %p154 = pneg %p59
        %p155 = pneg %p56
        %p156 = pneg %p80
        %p157 = pneg %p77
        %p158 = pneg %p106
        %p159 = pneg %p103
        %s160 = sand.u32 %s93, 1
        %s161 = scalar_lea.sflag [#allocation3], %s160
        %s162 = sand.u32 %s93, 1
        %s163 = smul.addr %s162, 256
        %s164 = scalar_lea.vmem [#allocation2], %s163
        %s165 = smul.u32 32, %s17
        %p166 = scmp.lt.s32.totalorder %s165, 63
        %s167 = scalar_select %p166, %s165, 63
        %s168 = smul.addr %s167, 8
        %s169 = scalar_lea.vmem %s0, %s168
        %s170 = smul.u32 32, %s17
        %s171 = smul.u32 32, %s17
        %v172 = vld [vmem:[%s169] sm:$0xff]
        %v173 = vld [vmem:[%s169 + $0x8] sm:$0xff]
        %v174 = vld [vmem:[%s169 + $0x10] sm:$0xff]
        %v175 = vld [vmem:[%s169 + $0x18] sm:$0xff]
        %v176 = vld [vmem:[%s169 + $0x20] sm:$0xff]
        %v177 = vld [vmem:[%s169 + $0x28] sm:$0xff]
        %v178 = vld [vmem:[%s169 + $0x30] sm:$0xff]
        %v179 = vld [vmem:[%s169 + $0x38] sm:$0xff]
        %v180 = vld [vmem:[%s169 + $0x40] sm:$0xff]
        %v181 = vld [vmem:[%s169 + $0x48] sm:$0xff]
        %v182 = vld [vmem:[%s169 + $0x50] sm:$0xff]
        %v183 = vld [vmem:[%s169 + $0x58] sm:$0xff]
        %v184 = vld [vmem:[%s169 + $0x60] sm:$0xff]
        %v185 = vld [vmem:[%s169 + $0x68] sm:$0xff]
        %v186 = vld [vmem:[%s169 + $0x70] sm:$0xff]
        %v187 = vld [vmem:[%s169 + $0x78] sm:$0xff]
        %v188 = vld [vmem:[%s169 + $0x80] sm:$0xff]
        %v189 = vld [vmem:[%s169 + $0x88] sm:$0xff]
        %v190 = vld [vmem:[%s169 + $0x90] sm:$0xff]
        %v191 = vld [vmem:[%s169 + $0x98] sm:$0xff]
        %v192 = vld [vmem:[%s169 + $0xa0] sm:$0xff]
        %v193 = vld [vmem:[%s169 + $0xa8] sm:$0xff]
        %v194 = vld [vmem:[%s169 + $0xb0] sm:$0xff]
        %v195 = vld [vmem:[%s169 + $0xb8] sm:$0xff]
        %v196 = vld [vmem:[%s169 + $0xc0] sm:$0xff]
        %v197 = vld [vmem:[%s169 + $0xc8] sm:$0xff]
        %v198 = vld [vmem:[%s169 + $0xd0] sm:$0xff]
        %v199 = vld [vmem:[%s169 + $0xd8] sm:$0xff]
        %v200 = vld [vmem:[%s169 + $0xe0] sm:$0xff]
        %v201 = vld [vmem:[%s169 + $0xe8] sm:$0xff]
        %v202 = vld [vmem:[%s169 + $0xf0] sm:$0xff]
        %v203 = vld [vmem:[%s169 + $0xf8] sm:$0xff]
        %v204 = vld [vmem:[%s1] sm:$0xff]
        %v205 = vld [vmem:[%s1 + $0x8] sm:$0xff]
        %v206 = vld [vmem:[%s1 + $0x10] sm:$0xff]
        %v207 = vld [vmem:[%s1 + $0x18] sm:$0xff]
        %v208 = vld [vmem:[%s2] sm:$0x1]
        %v210 = vlaneseq
        %v211 = vshrl.u32 %v210, 7
        %v212 = vsub.s32 0, %v211
        %v213 = vrot.slane %v208, %v212
        %vm215 = vcmask 261120
        %v217 = vsel %vm215, %v172, 0
        %v220 = vsel %vm215, %v173, 0
        %v223 = vsel %vm215, %v174, 0
        %v226 = vsel %vm215, %v175, 0
        %v229 = vsel %vm215, %v176, 0
        %v232 = vsel %vm215, %v177, 0
        %v235 = vsel %vm215, %v178, 0
        %v238 = vsel %vm215, %v179, 0
        %v241 = vsel %vm215, %v180, 0
        %v244 = vsel %vm215, %v181, 0
        %v247 = vsel %vm215, %v182, 0
        %v250 = vsel %vm215, %v183, 0
        %v253 = vsel %vm215, %v184, 0
        %v256 = vsel %vm215, %v185, 0
        %v259 = vsel %vm215, %v186, 0
        %v262 = vsel %vm215, %v187, 0
        %v265 = vsel %vm215, %v188, 0
        %v268 = vsel %vm215, %v189, 0
        %v271 = vsel %vm215, %v190, 0
        %v274 = vsel %vm215, %v191, 0
        %v277 = vsel %vm215, %v192, 0
        %v280 = vsel %vm215, %v193, 0
        %v283 = vsel %vm215, %v194, 0
        %v286 = vsel %vm215, %v195, 0
        %v289 = vsel %vm215, %v196, 0
        %v292 = vsel %vm215, %v197, 0
        %v295 = vsel %vm215, %v198, 0
        %v298 = vsel %vm215, %v199, 0
        %v301 = vsel %vm215, %v200, 0
        %v304 = vsel %vm215, %v201, 0
        %v307 = vsel %vm215, %v202, 0
        %v310 = vsel %vm215, %v203, 0
        %312 = vmatprep.subr.mxu0 0.0
        %313 = vmatpush1.msra.mxu0 %v204
        %314 = vmatprep.subr.mxu0 0.0
        %315 = vmatpush1.msra.mxu0 %v205
        %316 = vmatprep.subr.mxu0 0.0
        %317 = vmatpush1.msra.mxu0 %v206
        %318 = vmatprep.subr.mxu0 0.0
        %319 = vmatpush1.msra.mxu0 %v207
        %320 = vmatprep.subr.mxu0 0.0
        %321 = vmatpush1.msra.mxu0 0.0
        %322 = vmatprep.subr.mxu0 0.0
        %323 = vmatpush1.msra.mxu0 0.0
        %324 = vmatprep.subr.mxu0 0.0
        %325 = vmatpush1.msra.mxu0 0.0
        %326 = vmatprep.subr.mxu0 0.0
        %327 = vmatpush1.msra.mxu0 0.0
        %328 = vmatprep.subr.mxu0 0.0
        %329 = vmatpush1.msra.mxu0 0.0
        %330 = vmatprep.subr.mxu0 0.0
        %331 = vmatpush1.msra.mxu0 0.0
        %332 = vmatprep.subr.mxu0 0.0
        %333 = vmatpush1.msra.mxu0 0.0
        %334 = vmatprep.subr.mxu0 0.0
        %335 = vmatpush1.msra.mxu0 0.0
        %336 = vmatprep.subr.mxu0 0.0
        %337 = vmatpush1.msra.mxu0 0.0
        %338 = vmatprep.subr.mxu0 0.0
        %339 = vmatpush1.msra.mxu0 0.0
        %340 = vmatprep.subr.mxu0 0.0
        %341 = vmatpush1.msra.mxu0 0.0
        %342 = vmatprep.subr.mxu0 0.0
        %343 = vmatpush1.msra.mxu0 0.0
        %344 = vmatprep.subr.mxu0 0.0
        %345 = vmatpush1.msra.mxu0 0.0
        %346 = vmatprep.subr.mxu0 0.0
        %347 = vmatpush1.msra.mxu0 0.0
        %348 = vmatprep.subr.mxu0 0.0
        %349 = vmatpush1.msra.mxu0 0.0
        %350 = vmatprep.subr.mxu0 0.0
        %351 = vmatpush1.msra.mxu0 0.0
        %352 = vmatprep.subr.mxu0 0.0
        %353 = vmatpush1.msra.mxu0 0.0
        %354 = vmatprep.subr.mxu0 0.0
        %355 = vmatpush1.msra.mxu0 0.0
        %356 = vmatprep.subr.mxu0 0.0
        %357 = vmatpush1.msra.mxu0 0.0
        %358 = vmatprep.subr.mxu0 0.0
        %359 = vmatpush1.msra.mxu0 0.0
        %360 = vmatprep.subr.mxu0 0.0
        %361 = vmatpush1.msra.mxu0 0.0
        %362 = vmatprep.subr.mxu0 0.0
        %363 = vmatpush1.msra.mxu0 0.0
        %364 = vmatprep.subr.mxu0 0.0
        %365 = vmatpush1.msra.mxu0 0.0
        %366 = vmatprep.subr.mxu0 0.0
        %367 = vmatpush1.msra.mxu0 0.0
        %368 = vmatprep.subr.mxu0 0.0
        %369 = vmatpush1.msra.mxu0 0.0
        %370 = vmatprep.subr.mxu0 0.0
        %371 = vmatpush1.msra.mxu0 0.0
        %372 = vmatprep.subr.mxu0 0.0
        %373 = vmatpush1.msra.mxu0 0.0
        %374 = vmatprep.subr.mxu0 0.0
        %375 = vmatpush1.msra.mxu0 0.0
        %376 = vmatprep.mubr.f32.mxu0 0.0
        %377 = vmatmul.mubr.f32.gmra.mrb[0].mxu0 %v217
        %v378 = vpop.f32.mrb[0].mxu0
        %v379 = vadd.f32 %v213, %v378
        %v380 = vpop.f32.mrb[0].mxu0
        %381 = vmatprep.mubr.f32.mxu0 0.0
        %382 = vmatmul.mubr.f32.gmra.mrb[0].mxu0 %v220
        %v383 = vpop.f32.mrb[0].mxu0
        %v384 = vadd.f32 %v213, %v383
        %v385 = vpop.f32.mrb[0].mxu0
        %386 = vmatprep.mubr.f32.mxu0 0.0
        %387 = vmatmul.mubr.f32.gmra.mrb[0].mxu0 %v223
        %v388 = vpop.f32.mrb[0].mxu0
        %v389 = vadd.f32 %v213, %v388
        %v390 = vpop.f32.mrb[0].mxu0
        %391 = vmatprep.mubr.f32.mxu0 0.0
        %392 = vmatmul.mubr.f32.gmra.mrb[0].mxu0 %v226
        %v393 = vpop.f32.mrb[0].mxu0
        %v394 = vadd.f32 %v213, %v393
        %v395 = vpop.f32.mrb[0].mxu0
        %396 = vmatprep.mubr.f32.mxu0 0.0
        %397 = vmatmul.mubr.f32.gmra.mrb[0].mxu0 %v229
        %v398 = vpop.f32.mrb[0].mxu0
        %v399 = vadd.f32 %v213, %v398
        %v400 = vpop.f32.mrb[0].mxu0
        %401 = vmatprep.mubr.f32.mxu0 0.0
        %402 = vmatmul.mubr.f32.gmra.mrb[0].mxu0 %v232
        %v403 = vpop.f32.mrb[0].mxu0
        %v404 = vadd.f32 %v213, %v403
        %v405 = vpop.f32.mrb[0].mxu0
        %406 = vmatprep.mubr.f32.mxu0 0.0
        %407 = vmatmul.mubr.f32.gmra.mrb[0].mxu0 %v235
        %v408 = vpop.f32.mrb[0].mxu0
        %v409 = vadd.f32 %v213, %v408
        %v410 = vpop.f32.mrb[0].mxu0
        %411 = vmatprep.mubr.f32.mxu0 0.0
        %412 = vmatmul.mubr.f32.gmra.mrb[0].mxu0 %v238
        %v413 = vpop.f32.mrb[0].mxu0
        %v414 = vadd.f32 %v213, %v413
        %v415 = vpop.f32.mrb[0].mxu0
        %416 = vmatprep.mubr.f32.mxu0 0.0
        %417 = vmatmul.mubr.f32.gmra.mrb[0].mxu0 %v241
        %v418 = vpop.f32.mrb[0].mxu0
        %v419 = vadd.f32 %v213, %v418
        %v420 = vpop.f32.mrb[0].mxu0
        %421 = vmatprep.mubr.f32.mxu0 0.0
        %422 = vmatmul.mubr.f32.gmra.mrb[0].mxu0 %v244
        %v423 = vpop.f32.mrb[0].mxu0
        %v424 = vadd.f32 %v213, %v423
        %v425 = vpop.f32.mrb[0].mxu0
        %426 = vmatprep.mubr.f32.mxu0 0.0
        %427 = vmatmul.mubr.f32.gmra.mrb[0].mxu0 %v247
        %v428 = vpop.f32.mrb[0].mxu0
        %v429 = vadd.f32 %v213, %v428
        %v430 = vpop.f32.mrb[0].mxu0
        %431 = vmatprep.mubr.f32.mxu0 0.0
        %432 = vmatmul.mubr.f32.gmra.mrb[0].mxu0 %v250
        %v433 = vpop.f32.mrb[0].mxu0
        %v434 = vadd.f32 %v213, %v433
        %v435 = vpop.f32.mrb[0].mxu0
        %436 = vmatprep.mubr.f32.mxu0 0.0
        %437 = vmatmul.mubr.f32.gmra.mrb[0].mxu0 %v253
        %v438 = vpop.f32.mrb[0].mxu0
        %v439 = vadd.f32 %v213, %v438
        %v440 = vpop.f32.mrb[0].mxu0
        %441 = vmatprep.mubr.f32.mxu0 0.0
        %442 = vmatmul.mubr.f32.gmra.mrb[0].mxu0 %v256
        %v443 = vpop.f32.mrb[0].mxu0
        %v444 = vadd.f32 %v213, %v443
        %v445 = vpop.f32.mrb[0].mxu0
        %446 = vmatprep.mubr.f32.mxu0 0.0
        %447 = vmatmul.mubr.f32.gmra.mrb[0].mxu0 %v259
        %v448 = vpop.f32.mrb[0].mxu0
        %v449 = vadd.f32 %v213, %v448
        %v450 = vpop.f32.mrb[0].mxu0
        %451 = vmatprep.mubr.f32.mxu0 0.0
        %452 = vmatmul.mubr.f32.gmra.mrb[0].mxu0 %v262
        %v453 = vpop.f32.mrb[0].mxu0
        %v454 = vadd.f32 %v213, %v453
        %v455 = vpop.f32.mrb[0].mxu0
        %456 = vmatprep.mubr.f32.mxu0 0.0
        %457 = vmatmul.mubr.f32.gmra.mrb[0].mxu0 %v265
        %v458 = vpop.f32.mrb[0].mxu0
        %v459 = vadd.f32 %v213, %v458
        %v460 = vpop.f32.mrb[0].mxu0
        %461 = vmatprep.mubr.f32.mxu0 0.0
        %462 = vmatmul.mubr.f32.gmra.mrb[0].mxu0 %v268
        %v463 = vpop.f32.mrb[0].mxu0
        %v464 = vadd.f32 %v213, %v463
        %v465 = vpop.f32.mrb[0].mxu0
        %466 = vmatprep.mubr.f32.mxu0 0.0
        %467 = vmatmul.mubr.f32.gmra.mrb[0].mxu0 %v271
        %v468 = vpop.f32.mrb[0].mxu0
        %v469 = vadd.f32 %v213, %v468
        %v470 = vpop.f32.mrb[0].mxu0
        %471 = vmatprep.mubr.f32.mxu0 0.0
        %472 = vmatmul.mubr.f32.gmra.mrb[0].mxu0 %v274
        %v473 = vpop.f32.mrb[0].mxu0
        %v474 = vadd.f32 %v213, %v473
        %v475 = vpop.f32.mrb[0].mxu0
        %476 = vmatprep.mubr.f32.mxu0 0.0
        %477 = vmatmul.mubr.f32.gmra.mrb[0].mxu0 %v277
        %v478 = vpop.f32.mrb[0].mxu0
        %v479 = vadd.f32 %v213, %v478
        %v480 = vpop.f32.mrb[0].mxu0
        %481 = vmatprep.mubr.f32.mxu0 0.0
        %482 = vmatmul.mubr.f32.gmra.mrb[0].mxu0 %v280
        %v483 = vpop.f32.mrb[0].mxu0
        %v484 = vadd.f32 %v213, %v483
        %v485 = vpop.f32.mrb[0].mxu0
        %486 = vmatprep.mubr.f32.mxu0 0.0
        %487 = vmatmul.mubr.f32.gmra.mrb[0].mxu0 %v283
        %v488 = vpop.f32.mrb[0].mxu0
        %v489 = vadd.f32 %v213, %v488
        %v490 = vpop.f32.mrb[0].mxu0
        %491 = vmatprep.mubr.f32.mxu0 0.0
        %492 = vmatmul.mubr.f32.gmra.mrb[0].mxu0 %v286
        %v493 = vpop.f32.mrb[0].mxu0
        %v494 = vadd.f32 %v213, %v493
        %v495 = vpop.f32.mrb[0].mxu0
        %496 = vmatprep.mubr.f32.mxu0 0.0
        %497 = vmatmul.mubr.f32.gmra.mrb[0].mxu0 %v289
        %v498 = vpop.f32.mrb[0].mxu0
        %v499 = vadd.f32 %v213, %v498
        %v500 = vpop.f32.mrb[0].mxu0
        %501 = vmatprep.mubr.f32.mxu0 0.0
        %502 = vmatmul.mubr.f32.gmra.mrb[0].mxu0 %v292
        %v503 = vpop.f32.mrb[0].mxu0
        %v504 = vadd.f32 %v213, %v503
        %v505 = vpop.f32.mrb[0].mxu0
        %506 = vmatprep.mubr.f32.mxu0 0.0
        %507 = vmatmul.mubr.f32.gmra.mrb[0].mxu0 %v295
        %v508 = vpop.f32.mrb[0].mxu0
        %v509 = vadd.f32 %v213, %v508
        %v510 = vpop.f32.mrb[0].mxu0
        %511 = vmatprep.mubr.f32.mxu0 0.0
        %512 = vmatmul.mubr.f32.gmra.mrb[0].mxu0 %v298
        %v513 = vpop.f32.mrb[0].mxu0
        %v514 = vadd.f32 %v213, %v513
        %v515 = vpop.f32.mrb[0].mxu0
        %516 = vmatprep.mubr.f32.mxu0 0.0
        %517 = vmatmul.mubr.f32.gmra.mrb[0].mxu0 %v301
        %v518 = vpop.f32.mrb[0].mxu0
        %v519 = vadd.f32 %v213, %v518
        %v520 = vpop.f32.mrb[0].mxu0
        %521 = vmatprep.mubr.f32.mxu0 0.0
        %522 = vmatmul.mubr.f32.gmra.mrb[0].mxu0 %v304
        %v523 = vpop.f32.mrb[0].mxu0
        %v524 = vadd.f32 %v213, %v523
        %v525 = vpop.f32.mrb[0].mxu0
        %526 = vmatprep.mubr.f32.mxu0 0.0
        %527 = vmatmul.mubr.f32.gmra.mrb[0].mxu0 %v307
        %v528 = vpop.f32.mrb[0].mxu0
        %v529 = vadd.f32 %v213, %v528
        %v530 = vpop.f32.mrb[0].mxu0
        %531 = vmatprep.mubr.f32.mxu0 0.0
        %532 = vmatmul.mubr.f32.gmra.mrb[0].mxu0 %v310
        %v533 = vpop.f32.mrb[0].mxu0
        %v534 = vadd.f32 %v213, %v533
        %v535 = vpop.f32.mrb[0].mxu0
        %536 = vdwg.mxu0
        %537 = vst [vmem:[%s164] sm:$0xff] %v379
        %538 = vst [vmem:[%s164 + $0x8] sm:$0xff] %v384
        %539 = vst [vmem:[%s164 + $0x10] sm:$0xff] %v389
        %540 = vst [vmem:[%s164 + $0x18] sm:$0xff] %v394
        %541 = vst [vmem:[%s164 + $0x20] sm:$0xff] %v399
        %542 = vst [vmem:[%s164 + $0x28] sm:$0xff] %v404
        %543 = vst [vmem:[%s164 + $0x30] sm:$0xff] %v409
        %544 = vst [vmem:[%s164 + $0x38] sm:$0xff] %v414
        %545 = vst [vmem:[%s164 + $0x40] sm:$0xff] %v419
        %546 = vst [vmem:[%s164 + $0x48] sm:$0xff] %v424
        %547 = vst [vmem:[%s164 + $0x50] sm:$0xff] %v429
        %548 = vst [vmem:[%s164 + $0x58] sm:$0xff] %v434
        %549 = vst [vmem:[%s164 + $0x60] sm:$0xff] %v439
        %550 = vst [vmem:[%s164 + $0x68] sm:$0xff] %v444
        %551 = vst [vmem:[%s164 + $0x70] sm:$0xff] %v449
        %552 = vst [vmem:[%s164 + $0x78] sm:$0xff] %v454
        %553 = vst [vmem:[%s164 + $0x80] sm:$0xff] %v459
        %554 = vst [vmem:[%s164 + $0x88] sm:$0xff] %v464
        %555 = vst [vmem:[%s164 + $0x90] sm:$0xff] %v469
        %556 = vst [vmem:[%s164 + $0x98] sm:$0xff] %v474
        %557 = vst [vmem:[%s164 + $0xa0] sm:$0xff] %v479
        %558 = vst [vmem:[%s164 + $0xa8] sm:$0xff] %v484
        %559 = vst [vmem:[%s164 + $0xb0] sm:$0xff] %v489
        %560 = vst [vmem:[%s164 + $0xb8] sm:$0xff] %v494
        %561 = vst [vmem:[%s164 + $0xc0] sm:$0xff] %v499
        %562 = vst [vmem:[%s164 + $0xc8] sm:$0xff] %v504
        %563 = vst [vmem:[%s164 + $0xd0] sm:$0xff] %v509
        %564 = vst [vmem:[%s164 + $0xd8] sm:$0xff] %v514
        %565 = vst [vmem:[%s164 + $0xe0] sm:$0xff] %v519
        %566 = vst [vmem:[%s164 + $0xe8] sm:$0xff] %v524
        %567 = vst [vmem:[%s164 + $0xf0] sm:$0xff] %v529
        %568 = vst [vmem:[%s164 + $0xf8] sm:$0xff] %v534
        %s569 = sand.u32 %s93, 1
        %s570 = scalar_lea.sflag [#allocation3], %s569
        %s571 = sand.u32 %s93, 1
        %s572 = smul.addr %s571, 256
        %s573 = scalar_lea.vmem [#allocation2], %s572
        // Predicated region
        $region33: #{tpu_custom_call.1} parent=31 // pred_check
          %p574 = pneg %p103
        $region34: #{tpu_custom_call.1} parent=31 // pred_check_branch
          %576 = sbr.rel (%p574) target = $region36
        $region35: #{tpu_custom_call.1} parent=31 // pred_region
          %s577 = smul.u32 32, %s17
          %s579 = ssub.s32 4096, 4096
          %580 = vsyncadd %s570, %s579
          %s581 = smul.addr %s577, 128
          %s582 = scalar_lea.hbm %s3, %s581
          %s583 = sshll.u32 %s573, 4
          %s584 = int_to_ptr.vmem [resolvable:$true] %s583
          %589 = dma.vmem_to_hbm [thread:$0]  %s584, 4096, %s582, %s570, 128, 128, 8
        $region36: #{tpu_custom_call.1} parent=31 // pred_fallthru
          _
      $region32: #{tpu_custom_call.1} parent=5 // pred_fallthru
        _
      %p590 = scmp.le.s32.totalorder 2, %s12
      // Predicated region
      $region37: #{tpu_custom_call.1} parent=5 // pred_check
        %p591 = pneg %p590
      $region38: #{tpu_custom_call.1} parent=5 // pred_check_branch
        %593 = sbr.rel (%p591) target = $region40
      $region39: #{tpu_custom_call.1} parent=5 // pred_region
        %s594 = ssub.s32 %s12, 2
        // Predicated region
        $region41: #{tpu_custom_call.1} parent=39 // pred_check
          %p595 = pneg %p109
        $region42: #{tpu_custom_call.1} parent=39 // pred_check_branch
          %597 = sbr.rel (%p595) target = $region44
        $region43: #{tpu_custom_call.1} parent=39 // pred_region
          %s598 = sand.u32 %s94, 1
          %s599 = scalar_lea.sflag [#allocation3], %s598
          %s600 = sand.u32 %s94, 1
          %s601 = smul.addr %s600, 256
          %s602 = scalar_lea.vmem [#allocation2], %s601
          %603 = dma.done %s599, 4096
        $region44: #{tpu_custom_call.1} parent=39 // pred_fallthru
          _
      $region40: #{tpu_custom_call.1} parent=5 // pred_fallthru
        _
    $region6: #{tpu_custom_call.1} parent=1 // loop_footer
      %s16 = sadd.s32 1, %s12
    $region7: #{tpu_custom_call.1} parent=1 // loop_footer_branch
      %11 = sbr.rel target = $region3
    $region8: #{tpu_custom_call.1} parent=1 // loop_exit
      _
    %604 = vsyncpa [#allocation3], 1
    %s605 = scalar_lea.sflag [#allocation3], 1
    %606 = vsyncpa %s605, 1

</llo_original>
